<compile_context>
chip_gen: v5e
topology: v5e:2x2
jax: 0.10.0
libtpu: 0.0.40
codegen_flags: <defaults>
</compile_context>

<pallas_src>
import functools

import jax
import jax.numpy as jnp
from jax import lax
from jax.experimental import pallas as pl
from jax.experimental.pallas import tpu as pltpu


def _down_kernel(x_ref, w1_ref, s1_ref, b1_ref, w2_ref, s2_ref, b2_ref,
                 mask_ref, o_ref, in_buf, mid_buf, *, Hp, Wp):
    # x_ref   : (1, Cin, P) bf16    pooled input, spatial flattened on lanes
    # w*_ref  : (Cout, 9*Cin) bf16  stacked-tap weight matrix
    # s*/b*   : (C, 1) f32          folded BatchNorm scale / bias columns
    # mask_ref: (2, P) bf16         row 0: (j != 0), row 1: (j != Wp-1)
    # o_ref   : (1, Cout, P)        NCHW output, spatial flattened on lanes
    # in_buf  : (Cin,  Lf) bf16     H-padded flattened conv1 input, Lf=(Hp+2)*Wp+2
    # mid_buf : (Cmid, Lf) bf16     same layout for the conv1 -> conv2 intermediate
    P = Hp * Wp
    pad = Wp + 1                        # flat zero border at each end

    mask_l = mask_ref[0:1, :]           # kills wrap-around of the kx == 0 taps
    mask_r = mask_ref[1:2, :]           # kills wrap-around of the kx == 2 taps

    def zero_border(buf):
        # Only the tiny flat 1-px border is zeroed; interior is overwritten.
        zeros = jnp.zeros((buf.shape[0], pad), buf.dtype)
        buf[:, 0:pad] = zeros
        buf[:, pad + P:] = zeros

    def stacked_taps(buf):
        # Gather the nine 3x3 tap slabs into one (9*C, P) RHS.  Every tap is
        # a contiguous lane-shifted slice of the flat padded buffer.  The
        # horizontal wrap-around of the kx=0 / kx=2 taps is zeroed while the
        # stack is built (equivalent to masking after the channel
        # contraction).  Channel counts are assumed even (bf16 sublane
        # packing), true for UNet layers.
        slabs = []
        for ky in range(3):
            for kx in range(3):
                start = ky * Wp + kx
                slab = buf[:, start:start + P]
                if kx == 0:
                    slab = slab * mask_l
                elif kx == 2:
                    slab = slab * mask_r
                slabs.append(slab)
        return jnp.concatenate(slabs, axis=0)            # (9*C, P) bf16

    # ---- conv1 -> BN -> ReLU: single (Cmid, 9*Cin) @ (9*Cin, P) matmul ----
    zero_border(in_buf)
    in_buf[:, pad:pad + P] = x_ref[0]
    y1 = jnp.dot(w1_ref[...], stacked_taps(in_buf),
                 preferred_element_type=jnp.float32)
    y1 = jnp.maximum(y1 * s1_ref[...] + b1_ref[...], 0.0)

    # ---- conv2 -> BN -> ReLU: activation written straight into mid_buf ----
    zero_border(mid_buf)
    mid_buf[:, pad:pad + P] = y1.astype(mid_buf.dtype)
    y2 = jnp.dot(w2_ref[...], stacked_taps(mid_buf),
                 preferred_element_type=jnp.float32)
    y2 = jnp.maximum(y2 * s2_ref[...] + b2_ref[...], 0.0)

    o_ref[0] = y2.astype(o_ref.dtype)


def _vmem_limit_bytes():
    # Per-generation VMEM limit: ~85% of physical (leaves headroom), capped.
    try:
        cap = int(pltpu.get_tpu_info().vmem_capacity_bytes)
    except Exception:
        cap = 64 * 1024 * 1024
    return max(32 * 1024 * 1024, min(int(cap * 0.85), 112 * 1024 * 1024))


def down(x_nchw, w1, g1, be1, rm1, rv1, w2, g2, be2, rm2, rv2, eps=1e-5):
    """Down forward: MaxPool2d(2) -> DoubleConv.  x_nchw: (N,Cin,H,W); weights OIHW."""
    N, Cin, H, W = x_nchw.shape
    Hp, Wp = H // 2, W // 2
    P = Hp * Wp
    Lf = (Hp + 2) * Wp + 2
    Cmid = w1.shape[0]
    Cout = w2.shape[0]

    # ---- wrapper-side layout plumbing (pure XLA, no heavy compute) ----
    # MaxPool2d(2): transpose-free reshape + reduce; bf16 halves input DMA.
    pooled = x_nchw.reshape(N, Cin, Hp, 2, Wp, 2).max(axis=(3, 5))
    pooled = pooled.reshape(N, Cin, P).astype(jnp.bfloat16)

    # Stacked-tap weight matrices: w_mat[o, (3*ky + kx)*C + c] = w[o, c, ky, kx].
    w1_mat = jnp.transpose(w1, (0, 2, 3, 1)).reshape(Cmid, 9 * Cin).astype(jnp.bfloat16)
    w2_mat = jnp.transpose(w2, (0, 2, 3, 1)).reshape(Cout, 9 * Cmid).astype(jnp.bfloat16)

    # Inference BatchNorm folded into per-channel scale/bias columns (f32).
    inv1 = lax.rsqrt(rv1 + eps)
    inv2 = lax.rsqrt(rv2 + eps)
    s1 = (g1 * inv1).reshape(Cmid, 1).astype(jnp.float32)
    b1 = (be1 - rm1 * g1 * inv1).reshape(Cmid, 1).astype(jnp.float32)
    s2 = (g2 * inv2).reshape(Cout, 1).astype(jnp.float32)
    b2 = (be2 - rm2 * g2 * inv2).reshape(Cout, 1).astype(jnp.float32)

    # Column masks killing horizontal wrap-around of the kx=0 / kx=2 taps.
    col = jnp.arange(P, dtype=jnp.int32) % Wp
    masks = jnp.stack([col != 0, col != Wp - 1]).astype(jnp.bfloat16)   # (2, P)

    kernel = functools.partial(_down_kernel, Hp=Hp, Wp=Wp)

    out_flat = pl.pallas_call(
        kernel,
        out_shape=jax.ShapeDtypeStruct((N, Cout, P), x_nchw.dtype),
        grid_spec=pltpu.PrefetchScalarGridSpec(
            num_scalar_prefetch=0,
            grid=(N,),
            in_specs=[
                pl.BlockSpec((1, Cin, P), lambda n: (n, 0, 0)),
                pl.BlockSpec((Cmid, 9 * Cin), lambda n: (0, 0)),
                pl.BlockSpec((Cmid, 1), lambda n: (0, 0)),
                pl.BlockSpec((Cmid, 1), lambda n: (0, 0)),
                pl.BlockSpec((Cout, 9 * Cmid), lambda n: (0, 0)),
                pl.BlockSpec((Cout, 1), lambda n: (0, 0)),
                pl.BlockSpec((Cout, 1), lambda n: (0, 0)),
                pl.BlockSpec((2, P), lambda n: (0, 0)),
            ],
            out_specs=pl.BlockSpec((1, Cout, P), lambda n: (n, 0, 0)),
            scratch_shapes=[
                pltpu.VMEM((Cin, Lf), jnp.bfloat16),
                pltpu.VMEM((Cmid, Lf), jnp.bfloat16),
            ],
        ),
        compiler_params=pltpu.CompilerParams(
            dimension_semantics=("parallel",),
            vmem_limit_bytes=_vmem_limit_bytes(),
        ),
    )(pooled, w1_mat, s1, b1, w2_mat, s2, b2, masks)

    # (N, Cout, Hp*Wp) -> (N, Cout, Hp, Wp): free, layout-preserving reshape.
    return out_flat.reshape(N, Cout, Hp, Wp)


def _reference(x, w1, g1, be1, rm1, rv1, w2, g2, be2, rm2, rv2, eps=1e-5):
    """Pure-JAX reference for Down (maxpool + double conv) with the same
    bf16-input / f32-accumulate numerics as the kernel."""
    N, C, H, W = x.shape
    y = x.reshape(N, C, H // 2, 2, W // 2, 2).max(axis=(3, 5))   # MaxPool2d(2)

    def conv_bn_relu(y, w, g, be, rm, rv):
        y = y.astype(jnp.bfloat16).astype(jnp.float32)
        w = w.astype(jnp.bfloat16).astype(jnp.float32)
        y = lax.conv_general_dilated(
            y, w, (1, 1), "SAME",
            dimension_numbers=("NCHW", "OIHW", "NCHW"),
            precision=lax.Precision.HIGHEST)
        inv = lax.rsqrt(rv + eps)
        s = (g * inv)[None, :, None, None]
        b = (be - rm * g * inv)[None, :, None, None]
        return jnp.maximum(y * s + b, 0.0)

    y = conv_bn_relu(y, w1, g1, be1, rm1, rv1)
    y = conv_bn_relu(y, w2, g2, be2, rm2, rv2)
    return y


if __name__ == "__main__":
    N, Cin, H, W = 2, 4, 16, 16
    Cout = 8          # Down(in_channels=4, out_channels=8)
    Cmid = Cout       # DoubleConv default: mid_channels = out_channels

    key = jax.random.PRNGKey(0)
    ks = jax.random.split(key, 9)

    x = jax.random.normal(ks[0], (N, Cin, H, W), jnp.float32)

    # Conv weights (OIHW, no bias), BN params (inference running stats).
    w1 = jax.random.normal(ks[1], (Cmid, Cin, 3, 3), jnp.float32) * 0.2
    w2 = jax.random.normal(ks[2], (Cout, Cmid, 3, 3), jnp.float32) * 0.2
    g1 = 1.0 + 0.1 * jax.random.normal(ks[3], (Cmid,), jnp.float32)
    be1 = 0.1 * jax.random.normal(ks[4], (Cmid,), jnp.float32)
    rm1 = 0.1 * jax.random.normal(ks[5], (Cmid,), jnp.float32)
    rv1 = 1.0 + 0.1 * jax.random.uniform(ks[6], (Cmid,), jnp.float32)
    g2 = 1.0 + 0.1 * jax.random.normal(ks[7], (Cout,), jnp.float32)
    be2 = 0.1 * jax.random.normal(ks[8], (Cout,), jnp.float32)
    rm2 = 0.05 * jnp.arange(Cout, dtype=jnp.float32)
    rv2 = 1.0 + 0.02 * jnp.arange(Cout, dtype=jnp.float32)

    out = down(x, w1, g1, be1, rm1, rv1, w2, g2, be2, rm2, rv2)
    out = jax.block_until_ready(out)

    ref = _reference(x, w1, g1, be1, rm1, rv1, w2, g2, be2, rm2, rv2)
    assert out.shape == (N, Cout, H // 2, W // 2)
    max_err = float(jnp.max(jnp.abs(out - ref)))
    assert jnp.allclose(out, ref, atol=2e-2, rtol=2e-2), (
        f"mismatch vs reference (max abs err {max_err})")

    print("KERNEL_OK")
</pallas_src>

<mosaic_0001>
module attributes {stable_mosaic.version = 11 : i64} {
  func.func @_down_kernel(%arg0: i32, %arg1: memref<1x4x64xbf16, #tpu.memory_space<vmem>>, %arg2: memref<8x36xbf16, #tpu.memory_space<vmem>>, %arg3: memref<8x1xf32, #tpu.memory_space<vmem>>, %arg4: memref<8x1xf32, #tpu.memory_space<vmem>>, %arg5: memref<8x72xbf16, #tpu.memory_space<vmem>>, %arg6: memref<8x1xf32, #tpu.memory_space<vmem>>, %arg7: memref<8x1xf32, #tpu.memory_space<vmem>>, %arg8: memref<2x64xbf16, #tpu.memory_space<vmem>>, %arg9: memref<1x8x64xf32, #tpu.memory_space<vmem>>, %arg10: memref<4x82xbf16, #tpu.memory_space<vmem>>, %arg11: memref<8x82xbf16, #tpu.memory_space<vmem>>) attributes {dimension_semantics = [#tpu.dimension_semantics<parallel>], iteration_bounds = array<i64: 2>, scalar_prefetch = 0 : i64, scratch_operands = 2 : i64, tpu.core_type = #tpu.core_type<tc>, window_params = [{transform_indices = @transform_0, window_bounds = array<i64: 1, 4, 64>}, {pipeline_mode = #tpu.pipeline_mode<synchronous>, transform_indices = @transform_1, window_bounds = array<i64: 8, 36>}, {pipeline_mode = #tpu.pipeline_mode<synchronous>, transform_indices = @transform_2, window_bounds = array<i64: 8, 1>}, {pipeline_mode = #tpu.pipeline_mode<synchronous>, transform_indices = @transform_3, window_bounds = array<i64: 8, 1>}, {pipeline_mode = #tpu.pipeline_mode<synchronous>, transform_indices = @transform_4, window_bounds = array<i64: 8, 72>}, {pipeline_mode = #tpu.pipeline_mode<synchronous>, transform_indices = @transform_5, window_bounds = array<i64: 8, 1>}, {pipeline_mode = #tpu.pipeline_mode<synchronous>, transform_indices = @transform_6, window_bounds = array<i64: 8, 1>}, {pipeline_mode = #tpu.pipeline_mode<synchronous>, transform_indices = @transform_7, window_bounds = array<i64: 2, 64>}, {transform_indices = @transform_8, window_bounds = array<i64: 1, 8, 64>}]} {
    %c0 = arith.constant 0 : index
    %c0_0 = arith.constant 0 : index
    %0 = vector.load %arg8[%c0, %c0_0] : memref<2x64xbf16, #tpu.memory_space<vmem>>, vector<1x64xbf16>
    %c1 = arith.constant 1 : index
    %c0_1 = arith.constant 0 : index
    %1 = vector.load %arg8[%c1, %c0_1] : memref<2x64xbf16, #tpu.memory_space<vmem>>, vector<1x64xbf16>
    %cst = arith.constant 0.000000e+00 : bf16
    %2 = vector.broadcast %cst : bf16 to vector<4x9xbf16>
    %c0_2 = arith.constant 0 : index
    %c0_3 = arith.constant 0 : index
    %3 = vector.load %arg10[%c0_2, %c0_3] : memref<4x82xbf16, #tpu.memory_space<vmem>>, vector<4x9xbf16>
    tpu.vector_store %arg10[%c0_2, %c0_3], %2 {strides = array<i32>} : memref<4x82xbf16, #tpu.memory_space<vmem>>, vector<4x9xbf16>,
    %c0_4 = arith.constant 0 : index
    %c73 = arith.constant 73 : index
    %4 = vector.load %arg10[%c0_4, %c73] : memref<4x82xbf16, #tpu.memory_space<vmem>>, vector<4x9xbf16>
    tpu.vector_store %arg10[%c0_4, %c73], %2 {strides = array<i32>} : memref<4x82xbf16, #tpu.memory_space<vmem>>, vector<4x9xbf16>,
    %c0_5 = arith.constant 0 : index
    %c0_6 = arith.constant 0 : index
    %c0_7 = arith.constant 0 : index
    %5 = vector.load %arg1[%c0_5, %c0_6, %c0_7] : memref<1x4x64xbf16, #tpu.memory_space<vmem>>, vector<1x4x64xbf16>
    %6 = vector.shape_cast %5 : vector<1x4x64xbf16> to vector<4x64xbf16>
    %c0_8 = arith.constant 0 : index
    %c9 = arith.constant 9 : index
    %7 = vector.load %arg10[%c0_8, %c9] : memref<4x82xbf16, #tpu.memory_space<vmem>>, vector<4x64xbf16>
    tpu.vector_store %arg10[%c0_8, %c9], %6 {strides = array<i32>} : memref<4x82xbf16, #tpu.memory_space<vmem>>, vector<4x64xbf16>,
    %c0_9 = arith.constant 0 : index
    %c0_10 = arith.constant 0 : index
    %8 = vector.load %arg2[%c0_9, %c0_10] : memref<8x36xbf16, #tpu.memory_space<vmem>>, vector<8x36xbf16>
    %c0_11 = arith.constant 0 : index
    %c0_12 = arith.constant 0 : index
    %9 = vector.load %arg10[%c0_11, %c0_12] : memref<4x82xbf16, #tpu.memory_space<vmem>>, vector<4x64xbf16>
    %10 = vector.broadcast %0 : vector<1x64xbf16> to vector<4x64xbf16>
    %11 = arith.mulf %9, %10 : vector<4x64xbf16>
    %c0_13 = arith.constant 0 : index
    %c1_14 = arith.constant 1 : index
    %12 = vector.load %arg10[%c0_13, %c1_14] : memref<4x82xbf16, #tpu.memory_space<vmem>>, vector<4x64xbf16>
    %c0_15 = arith.constant 0 : index
    %c2 = arith.constant 2 : index
    %13 = vector.load %arg10[%c0_15, %c2] : memref<4x82xbf16, #tpu.memory_space<vmem>>, vector<4x64xbf16>
    %14 = vector.broadcast %1 : vector<1x64xbf16> to vector<4x64xbf16>
    %15 = arith.mulf %13, %14 : vector<4x64xbf16>
    %c0_16 = arith.constant 0 : index
    %c8 = arith.constant 8 : index
    %16 = vector.load %arg10[%c0_16, %c8] : memref<4x82xbf16, #tpu.memory_space<vmem>>, vector<4x64xbf16>
    %17 = vector.broadcast %0 : vector<1x64xbf16> to vector<4x64xbf16>
    %18 = arith.mulf %16, %17 : vector<4x64xbf16>
    %c0_17 = arith.constant 0 : index
    %c9_18 = arith.constant 9 : index
    %19 = vector.load %arg10[%c0_17, %c9_18] : memref<4x82xbf16, #tpu.memory_space<vmem>>, vector<4x64xbf16>
    %c0_19 = arith.constant 0 : index
    %c10 = arith.constant 10 : index
    %20 = vector.load %arg10[%c0_19, %c10] : memref<4x82xbf16, #tpu.memory_space<vmem>>, vector<4x64xbf16>
    %21 = vector.broadcast %1 : vector<1x64xbf16> to vector<4x64xbf16>
    %22 = arith.mulf %20, %21 : vector<4x64xbf16>
    %c0_20 = arith.constant 0 : index
    %c16 = arith.constant 16 : index
    %23 = vector.load %arg10[%c0_20, %c16] : memref<4x82xbf16, #tpu.memory_space<vmem>>, vector<4x64xbf16>
    %24 = vector.broadcast %0 : vector<1x64xbf16> to vector<4x64xbf16>
    %25 = arith.mulf %23, %24 : vector<4x64xbf16>
    %c0_21 = arith.constant 0 : index
    %c17 = arith.constant 17 : index
    %26 = vector.load %arg10[%c0_21, %c17] : memref<4x82xbf16, #tpu.memory_space<vmem>>, vector<4x64xbf16>
    %c0_22 = arith.constant 0 : index
    %c18 = arith.constant 18 : index
    %27 = vector.load %arg10[%c0_22, %c18] : memref<4x82xbf16, #tpu.memory_space<vmem>>, vector<4x64xbf16>
    %28 = vector.broadcast %1 : vector<1x64xbf16> to vector<4x64xbf16>
    %29 = arith.mulf %27, %28 : vector<4x64xbf16>
    %30 = tpu.concatenate %11, %12, %15, %18, %19, %22, %25, %26, %29 in 0 : vector<4x64xbf16>, vector<4x64xbf16>, vector<4x64xbf16>, vector<4x64xbf16>, vector<4x64xbf16>, vector<4x64xbf16>, vector<4x64xbf16>, vector<4x64xbf16>, vector<4x64xbf16> -> vector<36x64xbf16>
    %cst_23 = arith.constant dense<0.000000e+00> : vector<8x64xf32>
    %31 = tpu.matmul %8, %30, %cst_23 {dimension_numbers = #tpu.dot_dimension_numbers<[1], [0], [0], [1], [0, 0, 1, 1], [], []>} : vector<8x36xbf16>, vector<36x64xbf16>, vector<8x64xf32> -> vector<8x64xf32>
    %c0_24 = arith.constant 0 : index
    %c0_25 = arith.constant 0 : index
    %32 = vector.load %arg3[%c0_24, %c0_25] : memref<8x1xf32, #tpu.memory_space<vmem>>, vector<8x1xf32>
    %33 = vector.broadcast %32 : vector<8x1xf32> to vector<8x64xf32>
    %34 = arith.mulf %31, %33 : vector<8x64xf32>
    %c0_26 = arith.constant 0 : index
    %c0_27 = arith.constant 0 : index
    %35 = vector.load %arg4[%c0_26, %c0_27] : memref<8x1xf32, #tpu.memory_space<vmem>>, vector<8x1xf32>
    %36 = vector.broadcast %35 : vector<8x1xf32> to vector<8x64xf32>
    %37 = arith.addf %34, %36 : vector<8x64xf32>
    %cst_28 = arith.constant 0.000000e+00 : f32
    %38 = vector.broadcast %cst_28 : f32 to vector<8x64xf32>
    %39 = arith.maximumf %37, %38 : vector<8x64xf32>
    %cst_29 = arith.constant 0.000000e+00 : bf16
    %40 = vector.broadcast %cst_29 : bf16 to vector<8x9xbf16>
    %c0_30 = arith.constant 0 : index
    %c0_31 = arith.constant 0 : index
    %41 = vector.load %arg11[%c0_30, %c0_31] : memref<8x82xbf16, #tpu.memory_space<vmem>>, vector<8x9xbf16>
    tpu.vector_store %arg11[%c0_30, %c0_31], %40 {strides = array<i32>} : memref<8x82xbf16, #tpu.memory_space<vmem>>, vector<8x9xbf16>,
    %c0_32 = arith.constant 0 : index
    %c73_33 = arith.constant 73 : index
    %42 = vector.load %arg11[%c0_32, %c73_33] : memref<8x82xbf16, #tpu.memory_space<vmem>>, vector<8x9xbf16>
    tpu.vector_store %arg11[%c0_32, %c73_33], %40 {strides = array<i32>} : memref<8x82xbf16, #tpu.memory_space<vmem>>, vector<8x9xbf16>,
    %43 = arith.truncf %39 : vector<8x64xf32> to vector<8x64xbf16>
    %c0_34 = arith.constant 0 : index
    %c9_35 = arith.constant 9 : index
    %44 = vector.load %arg11[%c0_34, %c9_35] : memref<8x82xbf16, #tpu.memory_space<vmem>>, vector<8x64xbf16>
    tpu.vector_store %arg11[%c0_34, %c9_35], %43 {strides = array<i32>} : memref<8x82xbf16, #tpu.memory_space<vmem>>, vector<8x64xbf16>,
    %c0_36 = arith.constant 0 : index
    %c0_37 = arith.constant 0 : index
    %45 = vector.load %arg5[%c0_36, %c0_37] : memref<8x72xbf16, #tpu.memory_space<vmem>>, vector<8x72xbf16>
    %c0_38 = arith.constant 0 : index
    %c0_39 = arith.constant 0 : index
    %46 = vector.load %arg11[%c0_38, %c0_39] : memref<8x82xbf16, #tpu.memory_space<vmem>>, vector<8x64xbf16>
    %47 = vector.broadcast %0 : vector<1x64xbf16> to vector<8x64xbf16>
    %48 = arith.mulf %46, %47 : vector<8x64xbf16>
    %c0_40 = arith.constant 0 : index
    %c1_41 = arith.constant 1 : index
    %49 = vector.load %arg11[%c0_40, %c1_41] : memref<8x82xbf16, #tpu.memory_space<vmem>>, vector<8x64xbf16>
    %c0_42 = arith.constant 0 : index
    %c2_43 = arith.constant 2 : index
    %50 = vector.load %arg11[%c0_42, %c2_43] : memref<8x82xbf16, #tpu.memory_space<vmem>>, vector<8x64xbf16>
    %51 = vector.broadcast %1 : vector<1x64xbf16> to vector<8x64xbf16>
    %52 = arith.mulf %50, %51 : vector<8x64xbf16>
    %c0_44 = arith.constant 0 : index
    %c8_45 = arith.constant 8 : index
    %53 = vector.load %arg11[%c0_44, %c8_45] : memref<8x82xbf16, #tpu.memory_space<vmem>>, vector<8x64xbf16>
    %54 = vector.broadcast %0 : vector<1x64xbf16> to vector<8x64xbf16>
    %55 = arith.mulf %53, %54 : vector<8x64xbf16>
    %c0_46 = arith.constant 0 : index
    %c9_47 = arith.constant 9 : index
    %56 = vector.load %arg11[%c0_46, %c9_47] : memref<8x82xbf16, #tpu.memory_space<vmem>>, vector<8x64xbf16>
    %c0_48 = arith.constant 0 : index
    %c10_49 = arith.constant 10 : index
    %57 = vector.load %arg11[%c0_48, %c10_49] : memref<8x82xbf16, #tpu.memory_space<vmem>>, vector<8x64xbf16>
    %58 = vector.broadcast %1 : vector<1x64xbf16> to vector<8x64xbf16>
    %59 = arith.mulf %57, %58 : vector<8x64xbf16>
    %c0_50 = arith.constant 0 : index
    %c16_51 = arith.constant 16 : index
    %60 = vector.load %arg11[%c0_50, %c16_51] : memref<8x82xbf16, #tpu.memory_space<vmem>>, vector<8x64xbf16>
    %61 = vector.broadcast %0 : vector<1x64xbf16> to vector<8x64xbf16>
    %62 = arith.mulf %60, %61 : vector<8x64xbf16>
    %c0_52 = arith.constant 0 : index
    %c17_53 = arith.constant 17 : index
    %63 = vector.load %arg11[%c0_52, %c17_53] : memref<8x82xbf16, #tpu.memory_space<vmem>>, vector<8x64xbf16>
    %c0_54 = arith.constant 0 : index
    %c18_55 = arith.constant 18 : index
    %64 = vector.load %arg11[%c0_54, %c18_55] : memref<8x82xbf16, #tpu.memory_space<vmem>>, vector<8x64xbf16>
    %65 = vector.broadcast %1 : vector<1x64xbf16> to vector<8x64xbf16>
    %66 = arith.mulf %64, %65 : vector<8x64xbf16>
    %67 = tpu.concatenate %48, %49, %52, %55, %56, %59, %62, %63, %66 in 0 : vector<8x64xbf16>, vector<8x64xbf16>, vector<8x64xbf16>, vector<8x64xbf16>, vector<8x64xbf16>, vector<8x64xbf16>, vector<8x64xbf16>, vector<8x64xbf16>, vector<8x64xbf16> -> vector<72x64xbf16>
    %cst_56 = arith.constant dense<0.000000e+00> : vector<8x64xf32>
    %68 = tpu.matmul %45, %67, %cst_56 {dimension_numbers = #tpu.dot_dimension_numbers<[1], [0], [0], [1], [0, 0, 1, 1], [], []>} : vector<8x72xbf16>, vector<72x64xbf16>, vector<8x64xf32> -> vector<8x64xf32>
    %c0_57 = arith.constant 0 : index
    %c0_58 = arith.constant 0 : index
    %69 = vector.load %arg6[%c0_57, %c0_58] : memref<8x1xf32, #tpu.memory_space<vmem>>, vector<8x1xf32>
    %70 = vector.broadcast %69 : vector<8x1xf32> to vector<8x64xf32>
    %71 = arith.mulf %68, %70 : vector<8x64xf32>
    %c0_59 = arith.constant 0 : index
    %c0_60 = arith.constant 0 : index
    %72 = vector.load %arg7[%c0_59, %c0_60] : memref<8x1xf32, #tpu.memory_space<vmem>>, vector<8x1xf32>
    %73 = vector.broadcast %72 : vector<8x1xf32> to vector<8x64xf32>
    %74 = arith.addf %71, %73 : vector<8x64xf32>
    %cst_61 = arith.constant 0.000000e+00 : f32
    %75 = vector.broadcast %cst_61 : f32 to vector<8x64xf32>
    %76 = arith.maximumf %74, %75 : vector<8x64xf32>
    %c0_62 = arith.constant 0 : index
    %c0_63 = arith.constant 0 : index
    %c0_64 = arith.constant 0 : index
    %77 = vector.load %arg9[%c0_62, %c0_63, %c0_64] : memref<1x8x64xf32, #tpu.memory_space<vmem>>, vector<1x8x64xf32>
    %78 = vector.shape_cast %77 : vector<1x8x64xf32> to vector<8x64xf32>
    %79 = vector.shape_cast %76 : vector<8x64xf32> to vector<1x8x64xf32>
    tpu.vector_store %arg9[%c0_62, %c0_63, %c0_64], %79 {strides = array<i32>} : memref<1x8x64xf32, #tpu.memory_space<vmem>>, vector<1x8x64xf32>,
    return
  }
  func.func @transform_0(%arg0: i32) -> (i32, i32, i32) {
    %c0_i32 = arith.constant 0 : i32
    %c0_i32_0 = arith.constant 0 : i32
    %c0_i32_1 = arith.constant 0 : i32
    return %arg0, %c0_i32, %c0_i32_0 : i32, i32, i32
  }
  func.func @transform_1(%arg0: i32) -> (i32, i32) {
    %c0_i32 = arith.constant 0 : i32
    %c0_i32_0 = arith.constant 0 : i32
    %c0_i32_1 = arith.constant 0 : i32
    return %c0_i32, %c0_i32_0 : i32, i32
  }
  func.func @transform_2(%arg0: i32) -> (i32, i32) {
    %c0_i32 = arith.constant 0 : i32
    %c0_i32_0 = arith.constant 0 : i32
    %c0_i32_1 = arith.constant 0 : i32
    return %c0_i32, %c0_i32_0 : i32, i32
  }
  func.func @transform_3(%arg0: i32) -> (i32, i32) {
    %c0_i32 = arith.constant 0 : i32
    %c0_i32_0 = arith.constant 0 : i32
    %c0_i32_1 = arith.constant 0 : i32
    return %c0_i32, %c0_i32_0 : i32, i32
  }
  func.func @transform_4(%arg0: i32) -> (i32, i32) {
    %c0_i32 = arith.constant 0 : i32
    %c0_i32_0 = arith.constant 0 : i32
    %c0_i32_1 = arith.constant 0 : i32
    return %c0_i32, %c0_i32_0 : i32, i32
  }
  func.func @transform_5(%arg0: i32) -> (i32, i32) {
    %c0_i32 = arith.constant 0 : i32
    %c0_i32_0 = arith.constant 0 : i32
    %c0_i32_1 = arith.constant 0 : i32
    return %c0_i32, %c0_i32_0 : i32, i32
  }
  func.func @transform_6(%arg0: i32) -> (i32, i32) {
    %c0_i32 = arith.constant 0 : i32
    %c0_i32_0 = arith.constant 0 : i32
    %c0_i32_1 = arith.constant 0 : i32
    return %c0_i32, %c0_i32_0 : i32, i32
  }
  func.func @transform_7(%arg0: i32) -> (i32, i32) {
    %c0_i32 = arith.constant 0 : i32
    %c0_i32_0 = arith.constant 0 : i32
    %c0_i32_1 = arith.constant 0 : i32
    return %c0_i32, %c0_i32_0 : i32, i32
  }
  func.func @transform_8(%arg0: i32) -> (i32, i32, i32) {
    %c0_i32 = arith.constant 0 : i32
    %c0_i32_0 = arith.constant 0 : i32
    %c0_i32_1 = arith.constant 0 : i32
    return %arg0, %c0_i32, %c0_i32_0 : i32, i32, i32
  }
}

</mosaic_0001>

<llo_original>
// kernel: tpu_custom_call.1
$region0: #{tpu_custom_call.1}
  #allocation0 [shape = 'u32[]', space=smem, size = 0x4, offset = 0x4, fixed_abs, tag = 'smem constant byte address 0x4 - core index']
  #allocation1 [shape = 'u32[72,128]{1,0:T(1,128)}', space=vmem, size = 0x9000, scoped, tag = 'internal scratch']
  #allocation2 [shape = 'bf16[4,82]{1,0:T(4,128)(2,1)}', space=vmem, size = 0x400, scoped, tag = 'scratch operand']
  #allocation3 [shape = 'bf16[8,82]{1,0:T(8,128)(2,1)}', space=vmem, size = 0x800, scoped, tag = 'scratch operand']
  %s0 = inlined_call_operand.vmem [shape: bf16[2,4,64], index: 0, kind: input, shape index: {}]
  %s1 = inlined_call_operand.vmem [shape: bf16[8,36], index: 1, kind: input, shape index: {}]
  %s2 = inlined_call_operand.vmem [shape: f32[8,1], index: 2, kind: input, shape index: {}]
  %s3 = inlined_call_operand.vmem [shape: f32[8,1], index: 3, kind: input, shape index: {}]
  %s4 = inlined_call_operand.vmem [shape: bf16[8,72], index: 4, kind: input, shape index: {}]
  %s5 = inlined_call_operand.vmem [shape: f32[8,1], index: 5, kind: input, shape index: {}]
  %s6 = inlined_call_operand.vmem [shape: f32[8,1], index: 6, kind: input, shape index: {}]
  %s7 = inlined_call_operand.vmem [shape: bf16[2,64], index: 7, kind: input, shape index: {}]
  %s8 = inlined_call_operand.hbm [shape: f32[2,8,64], index: 8, kind: output, shape index: {}]
  %s9 = sld [smem:[#allocation0]]
  $region65: #{tpu_custom_call.1} parent=0
    _
  %s11 = ssub.s32 1, %s9
  %s12 = scalar_select 0, %s11, %s9
  $region1: #{tpu_custom_call.1} parent=0
    #allocation4 [shape = 'u8[8192]{0}', space=vmem, size = 0x2000, scoped, tag = 'output window, operand 0']
    #allocation5 [shape = 's32[2]{0}', space=sflag, size = 0x8, scoped, tag = 'scoped memory for tpu_custom_call.1']
    %13 = vsyncpa [#allocation5], 0
    %s14 = scalar_lea.sflag [#allocation5], 1
    %15 = vsyncpa %s14, 0
    loop: start=0, step=1, limit=4
    $region2: #{tpu_custom_call.1} parent=1 // loop_pre_header
      _
    $region3: #{tpu_custom_call.1} parent=1 // loop_header
      %s17 = sphi 0, %s21
      %p18 = scmp.ge.s32.totalorder %s17, 4
      %s27 = sphi 0, %s29
      %s30 = sphi 0, %s27
      %s31 = sphi 0, %s30
      %s47 = sphi 0, %s31
      %s51 = sphi 0, %s51
      %s53 = sphi 0, %s51
      %s54 = sphi 0, %s53
      %s68 = sphi 0, %s54
      %s72 = sphi 0, %s72
      %s74 = sphi 0, %s72
      %s75 = sphi 0, %s74
      %s89 = sphi 0, %s75
      %s93 = sphi 0, %s93
      %s95 = sphi 0, %s93
      %s96 = sphi 0, %s95
      %s110 = sphi 0, %s96
      %s114 = sphi 0, %s114
      %s116 = sphi 0, %s114
      %s117 = sphi 0, %s116
      %s131 = sphi 0, %s117
      %s135 = sphi 0, %s135
      %s137 = sphi 0, %s135
      %s138 = sphi 0, %s137
      %s152 = sphi 0, %s138
      %s156 = sphi 0, %s156
      %s158 = sphi 0, %s156
      %s159 = sphi 0, %s158
      %s173 = sphi 0, %s159
      %s177 = sphi 0, %s177
      %s179 = sphi 0, %s177
      %s180 = sphi 0, %s179
      %s194 = sphi 0, %s180
      %s200 = sphi 0, %s202
      %s203 = sphi 0, %s200
      %s204 = sphi 0, %s203
      %s220 = sphi 0, %s204
    $region4: #{tpu_custom_call.1} parent=1 // loop_header_branch
      %20 = sbr.rel (%p18) target = $region8
    $region5: #{tpu_custom_call.1} parent=1 // loop_body
      %s22 = ssub.s32 %s17, 1
      %s23 = ssub.s32 %s17, 2
      %s24 = sadd.s32 %s17, 1
      %s25 = ssub.s32 %s17, %s24
      %p26 = scmp.eq.s32.totalorder %s25, 0
      %s28 = sadd.s32 %s27, 1
      %s29 = scalar_select %p26, %s27, %s28
      %p32 = pneg %p26
      %p33 = scmp.eq.s32.totalorder %s17, 1
      %p34 = por %p32, %p33
      %p35 = scmp.ne.s32.totalorder %s27, %s30
      %p36 = scmp.eq.s32.totalorder %s17, 0
      %p37 = por %p35, %p36
      %p38 = scmp.ne.s32.totalorder %s27, %s30
      %p39 = scmp.eq.s32.totalorder %s22, 1
      %p40 = por %p38, %p39
      %p41 = scmp.ne.s32.totalorder %s30, %s31
      %p42 = scmp.eq.s32.totalorder %s22, 0
      %p43 = por %p41, %p42
      %p44 = scmp.ne.s32.totalorder %s30, %s31
      %p45 = scmp.eq.s32.totalorder %s23, 1
      %p46 = por %p44, %p45
      %p48 = scmp.ne.s32.totalorder %s31, %s47
      %p49 = scmp.eq.s32.totalorder %s23, 0
      %p50 = por %p48, %p49
      %s52 = sadd.s32 %s51, 1
      %p55 = scmp.eq.s32.totalorder %s17, 1
      %p56 = scmp.ne.s32.totalorder %s51, %s53
      %p57 = scmp.eq.s32.totalorder %s17, 0
      %p58 = por %p56, %p57
      %p59 = scmp.ne.s32.totalorder %s51, %s53
      %p60 = scmp.eq.s32.totalorder %s22, 1
      %p61 = por %p59, %p60
      %p62 = scmp.ne.s32.totalorder %s53, %s54
      %p63 = scmp.eq.s32.totalorder %s22, 0
      %p64 = por %p62, %p63
      %p65 = scmp.ne.s32.totalorder %s53, %s54
      %p66 = scmp.eq.s32.totalorder %s23, 1
      %p67 = por %p65, %p66
      %p69 = scmp.ne.s32.totalorder %s54, %s68
      %p70 = scmp.eq.s32.totalorder %s23, 0
      %p71 = por %p69, %p70
      %s73 = sadd.s32 %s72, 1
      %p76 = scmp.eq.s32.totalorder %s17, 1
      %p77 = scmp.ne.s32.totalorder %s72, %s74
      %p78 = scmp.eq.s32.totalorder %s17, 0
      %p79 = por %p77, %p78
      %p80 = scmp.ne.s32.totalorder %s72, %s74
      %p81 = scmp.eq.s32.totalorder %s22, 1
      %p82 = por %p80, %p81
      %p83 = scmp.ne.s32.totalorder %s74, %s75
      %p84 = scmp.eq.s32.totalorder %s22, 0
      %p85 = por %p83, %p84
      %p86 = scmp.ne.s32.totalorder %s74, %s75
      %p87 = scmp.eq.s32.totalorder %s23, 1
      %p88 = por %p86, %p87
      %p90 = scmp.ne.s32.totalorder %s75, %s89
      %p91 = scmp.eq.s32.totalorder %s23, 0
      %p92 = por %p90, %p91
      %s94 = sadd.s32 %s93, 1
      %p97 = scmp.eq.s32.totalorder %s17, 1
      %p98 = scmp.ne.s32.totalorder %s93, %s95
      %p99 = scmp.eq.s32.totalorder %s17, 0
      %p100 = por %p98, %p99
      %p101 = scmp.ne.s32.totalorder %s93, %s95
      %p102 = scmp.eq.s32.totalorder %s22, 1
      %p103 = por %p101, %p102
      %p104 = scmp.ne.s32.totalorder %s95, %s96
      %p105 = scmp.eq.s32.totalorder %s22, 0
      %p106 = por %p104, %p105
      %p107 = scmp.ne.s32.totalorder %s95, %s96
      %p108 = scmp.eq.s32.totalorder %s23, 1
      %p109 = por %p107, %p108
      %p111 = scmp.ne.s32.totalorder %s96, %s110
      %p112 = scmp.eq.s32.totalorder %s23, 0
      %p113 = por %p111, %p112
      %s115 = sadd.s32 %s114, 1
      %p118 = scmp.eq.s32.totalorder %s17, 1
      %p119 = scmp.ne.s32.totalorder %s114, %s116
      %p120 = scmp.eq.s32.totalorder %s17, 0
      %p121 = por %p119, %p120
      %p122 = scmp.ne.s32.totalorder %s114, %s116
      %p123 = scmp.eq.s32.totalorder %s22, 1
      %p124 = por %p122, %p123
      %p125 = scmp.ne.s32.totalorder %s116, %s117
      %p126 = scmp.eq.s32.totalorder %s22, 0
      %p127 = por %p125, %p126
      %p128 = scmp.ne.s32.totalorder %s116, %s117
      %p129 = scmp.eq.s32.totalorder %s23, 1
      %p130 = por %p128, %p129
      %p132 = scmp.ne.s32.totalorder %s117, %s131
      %p133 = scmp.eq.s32.totalorder %s23, 0
      %p134 = por %p132, %p133
      %s136 = sadd.s32 %s135, 1
      %p139 = scmp.eq.s32.totalorder %s17, 1
      %p140 = scmp.ne.s32.totalorder %s135, %s137
      %p141 = scmp.eq.s32.totalorder %s17, 0
      %p142 = por %p140, %p141
      %p143 = scmp.ne.s32.totalorder %s135, %s137
      %p144 = scmp.eq.s32.totalorder %s22, 1
      %p145 = por %p143, %p144
      %p146 = scmp.ne.s32.totalorder %s137, %s138
      %p147 = scmp.eq.s32.totalorder %s22, 0
      %p148 = por %p146, %p147
      %p149 = scmp.ne.s32.totalorder %s137, %s138
      %p150 = scmp.eq.s32.totalorder %s23, 1
      %p151 = por %p149, %p150
      %p153 = scmp.ne.s32.totalorder %s138, %s152
      %p154 = scmp.eq.s32.totalorder %s23, 0
      %p155 = por %p153, %p154
      %s157 = sadd.s32 %s156, 1
      %p160 = scmp.eq.s32.totalorder %s17, 1
      %p161 = scmp.ne.s32.totalorder %s156, %s158
      %p162 = scmp.eq.s32.totalorder %s17, 0
      %p163 = por %p161, %p162
      %p164 = scmp.ne.s32.totalorder %s156, %s158
      %p165 = scmp.eq.s32.totalorder %s22, 1
      %p166 = por %p164, %p165
      %p167 = scmp.ne.s32.totalorder %s158, %s159
      %p168 = scmp.eq.s32.totalorder %s22, 0
      %p169 = por %p167, %p168
      %p170 = scmp.ne.s32.totalorder %s158, %s159
      %p171 = scmp.eq.s32.totalorder %s23, 1
      %p172 = por %p170, %p171
      %p174 = scmp.ne.s32.totalorder %s159, %s173
      %p175 = scmp.eq.s32.totalorder %s23, 0
      %p176 = por %p174, %p175
      %s178 = sadd.s32 %s177, 1
      %p181 = scmp.eq.s32.totalorder %s17, 1
      %p182 = scmp.ne.s32.totalorder %s177, %s179
      %p183 = scmp.eq.s32.totalorder %s17, 0
      %p184 = por %p182, %p183
      %p185 = scmp.ne.s32.totalorder %s177, %s179
      %p186 = scmp.eq.s32.totalorder %s22, 1
      %p187 = por %p185, %p186
      %p188 = scmp.ne.s32.totalorder %s179, %s180
      %p189 = scmp.eq.s32.totalorder %s22, 0
      %p190 = por %p188, %p189
      %p191 = scmp.ne.s32.totalorder %s179, %s180
      %p192 = scmp.eq.s32.totalorder %s23, 1
      %p193 = por %p191, %p192
      %p195 = scmp.ne.s32.totalorder %s180, %s194
      %p196 = scmp.eq.s32.totalorder %s23, 0
      %p197 = por %p195, %p196
      %s198 = ssub.s32 %s17, %s24
      %p199 = scmp.eq.s32.totalorder %s198, 0
      %s201 = sadd.s32 %s200, 1
      %s202 = scalar_select %p199, %s200, %s201
      %p205 = pneg %p199
      %p206 = scmp.eq.s32.totalorder %s17, 1
      %p207 = por %p205, %p206
      %p208 = scmp.ne.s32.totalorder %s200, %s203
      %p209 = scmp.eq.s32.totalorder %s17, 0
      %p210 = por %p208, %p209
      %p211 = scmp.ne.s32.totalorder %s200, %s203
      %p212 = scmp.eq.s32.totalorder %s22, 1
      %p213 = por %p211, %p212
      %p214 = scmp.ne.s32.totalorder %s203, %s204
      %p215 = scmp.eq.s32.totalorder %s22, 0
      %p216 = por %p214, %p215
      %p217 = scmp.ne.s32.totalorder %s203, %s204
      %p218 = scmp.eq.s32.totalorder %s23, 1
      %p219 = por %p217, %p218
      %p221 = scmp.ne.s32.totalorder %s204, %s220
      %p222 = scmp.eq.s32.totalorder %s23, 0
      %p223 = por %p221, %p222
      %p224 = scmp.le.s32.totalorder 1, %s17
      %p225 = scmp.lt.s32.totalorder %s17, 3
      %p226 = pnand %p224, %p225
      %p227 = pneg %p226
      // Predicated region
      $region9: #{tpu_custom_call.1} parent=5 // pred_check
        _
      $region10: #{tpu_custom_call.1} parent=5 // pred_check_branch
        %229 = sbr.rel (%p226) target = $region12
      $region11: #{tpu_custom_call.1} parent=5 // pred_region
        %s230 = ssub.s32 %s17, 1
        // Predicated region
        $region13: #{tpu_custom_call.1} parent=11 // pred_check
          %p231 = pneg %p64
        $region14: #{tpu_custom_call.1} parent=11 // pred_check_branch
          %233 = sbr.rel (%p231) target = $region16
        $region15: #{tpu_custom_call.1} parent=11 // pred_region
          _
        $region16: #{tpu_custom_call.1} parent=11 // pred_fallthru
          _
        // Predicated region
        $region17: #{tpu_custom_call.1} parent=11 // pred_check
          %p234 = pneg %p85
        $region18: #{tpu_custom_call.1} parent=11 // pred_check_branch
          %236 = sbr.rel (%p234) target = $region20
        $region19: #{tpu_custom_call.1} parent=11 // pred_region
          _
        $region20: #{tpu_custom_call.1} parent=11 // pred_fallthru
          _
        // Predicated region
        $region21: #{tpu_custom_call.1} parent=11 // pred_check
          %p237 = pneg %p106
        $region22: #{tpu_custom_call.1} parent=11 // pred_check_branch
          %239 = sbr.rel (%p237) target = $region24
        $region23: #{tpu_custom_call.1} parent=11 // pred_region
          _
        $region24: #{tpu_custom_call.1} parent=11 // pred_fallthru
          _
        // Predicated region
        $region25: #{tpu_custom_call.1} parent=11 // pred_check
          %p240 = pneg %p127
        $region26: #{tpu_custom_call.1} parent=11 // pred_check_branch
          %242 = sbr.rel (%p240) target = $region28
        $region27: #{tpu_custom_call.1} parent=11 // pred_region
          _
        $region28: #{tpu_custom_call.1} parent=11 // pred_fallthru
          _
        // Predicated region
        $region29: #{tpu_custom_call.1} parent=11 // pred_check
          %p243 = pneg %p148
        $region30: #{tpu_custom_call.1} parent=11 // pred_check_branch
          %245 = sbr.rel (%p243) target = $region32
        $region31: #{tpu_custom_call.1} parent=11 // pred_region
          _
        $region32: #{tpu_custom_call.1} parent=11 // pred_fallthru
          _
        // Predicated region
        $region33: #{tpu_custom_call.1} parent=11 // pred_check
          %p246 = pneg %p169
        $region34: #{tpu_custom_call.1} parent=11 // pred_check_branch
          %248 = sbr.rel (%p246) target = $region36
        $region35: #{tpu_custom_call.1} parent=11 // pred_region
          _
        $region36: #{tpu_custom_call.1} parent=11 // pred_fallthru
          _
        // Predicated region
        $region37: #{tpu_custom_call.1} parent=11 // pred_check
          %p249 = pneg %p190
        $region38: #{tpu_custom_call.1} parent=11 // pred_check_branch
          %251 = sbr.rel (%p249) target = $region40
        $region39: #{tpu_custom_call.1} parent=11 // pred_region
          _
        $region40: #{tpu_custom_call.1} parent=11 // pred_fallthru
          _
      $region12: #{tpu_custom_call.1} parent=5 // pred_fallthru
        _
      %p252 = scmp.lt.s32.totalorder %s17, 2
      // Predicated region
      $region41: #{tpu_custom_call.1} parent=5 // pred_check
        %p253 = pneg %p252
      $region42: #{tpu_custom_call.1} parent=5 // pred_check_branch
        %255 = sbr.rel (%p253) target = $region44
      $region43: #{tpu_custom_call.1} parent=5 // pred_region
        // Predicated region
        $region45: #{tpu_custom_call.1} parent=43 // pred_check
          %p256 = pneg %p37
        $region46: #{tpu_custom_call.1} parent=43 // pred_check_branch
          %258 = sbr.rel (%p256) target = $region48
        $region47: #{tpu_custom_call.1} parent=43 // pred_region
          %p259 = scmp.lt.s32.totalorder %s17, 1
          %s260 = scalar_select %p259, %s17, 1
          %s261 = smul.addr %s260, 2
          %s262 = scalar_lea.vmem %s0, %s261
        $region48: #{tpu_custom_call.1} parent=43 // pred_fallthru
          _
      $region44: #{tpu_custom_call.1} parent=5 // pred_fallthru
        _
      %p263 = scmp.le.s32.totalorder 1, %s17
      %p264 = scmp.lt.s32.totalorder %s17, 3
      %p265 = pnand %p263, %p264
      %p266 = pneg %p265
      // Predicated region
      $region49: #{tpu_custom_call.1} parent=5 // pred_check
        _
      $region50: #{tpu_custom_call.1} parent=5 // pred_check_branch
        %268 = sbr.rel (%p265) target = $region52
      $region51: #{tpu_custom_call.1} parent=5 // pred_region
        %s269 = ssub.s32 %s17, 1
        %p270 = scmp.lt.s32.totalorder %s22, 1
        %s271 = scalar_select %p270, %s22, 1
        %s272 = smul.addr %s271, 2
        %s273 = scalar_lea.vmem %s0, %s272
        %p274 = pneg %p43
        %p275 = pneg %p40
        %p276 = pneg %p64
        %p277 = pneg %p61
        %p278 = pneg %p85
        %p279 = pneg %p82
        %p280 = pneg %p106
        %p281 = pneg %p103
        %p282 = pneg %p127
        %p283 = pneg %p124
        %p284 = pneg %p148
        %p285 = pneg %p145
        %p286 = pneg %p169
        %p287 = pneg %p166
        %p288 = pneg %p190
        %p289 = pneg %p187
        %p290 = pneg %p216
        %p291 = pneg %p213
        %s292 = sand.u32 %s203, 1
        %s293 = scalar_lea.sflag [#allocation5], %s292
        %s294 = sand.u32 %s203, 1
        %s295 = smul.addr %s294, 8
        %s296 = scalar_lea.vmem [#allocation4], %s295
        %p297 = scmp.lt.s32.totalorder %s22, 1
        %s298 = scalar_select %p297, %s22, 1
        %s299 = smul.addr %s298, 2
        %s300 = scalar_lea.vmem %s0, %s299
        %v302 = vld [vmem:[%s7] sm:$0x1]
        %vm303 = vcmask 66560
        %304 = vst.msk [vmem:[#allocation2] sm:$0x3] %vm303, 0
        %vm305 = vcmask 665160
        %306 = vst.msk [vmem:[#allocation2] sm:$0x3] %vm305, 0
        %v307 = vld [vmem:[%s300] sm:$0x3]
        %309 = vrot.lane.b32.xlu0 %v307, 9
        %v310 = vpop.permute.xlu0 %309
        %vm312 = vcmask 590920
        %313 = vst.msk [vmem:[#allocation2] sm:$0x3] %vm312, %v310
        %v314 = vld [vmem:[%s1] sm:$0xf]
        %v315 = vld [vmem:[#allocation2] sm:$0x3]
        %v317 = vpack.i.b16 %v302, %v302
        %v319 = vperm.slane %v317, 0
        %v320 = vunpack.c.l.bf16 %v315
        %v321 = vunpack.c.l.bf16 %v319
        %v322 = vmul.f32 %v320, %v321
        %v323 = vpack.c.bf16 %v322, %v322
        %v324 = vshrl.u32 %v302, 16
        %v325 = vpack.i.b16 %v324, %v324
        %v327 = vperm.slane %v325, 0
        %v328 = vunpack.c.l.bf16 %v327
        %330 = vrot.lane.b32.xlu0 %v328, 2
        %v331 = vpop.permute.xlu0 %330
        %v333 = vmul.f32 %v320, %v331
        %v334 = vpack.c.bf16 %v333, %v333
        %336 = vrot.lane.b32.xlu0 %v321, 8
        %v337 = vpop.permute.xlu0 %336
        %v339 = vmul.f32 %v320, %v337
        %v340 = vpack.c.bf16 %v339, %v339
        %341 = vrot.lane.b32.xlu0 %v328, 10
        %v342 = vpop.permute.xlu0 %341
        %v344 = vmul.f32 %v320, %v342
        %v345 = vpack.c.bf16 %v344, %v344
        %346 = vrot.lane.b32.xlu0 %v321, 16
        %v347 = vpop.permute.xlu0 %346
        %v349 = vmul.f32 %v320, %v347
        %v350 = vpack.c.bf16 %v349, %v349
        %351 = vrot.lane.b32.xlu0 %v328, 18
        %v352 = vpop.permute.xlu0 %351
        %v354 = vmul.f32 %v320, %v352
        %v355 = vpack.c.bf16 %v354, %v354
        %s357 = scalar_lea.vmem [#allocation1], 1
        %358 = vst [vmem:[%s357] ss:$4 sm:$0xff] %v315
        %v359 = vld.sshfl [vmem:[#allocation1] sm:$0xff pattern:$0x73625140]
        %361 = vrot.lane.b32.xlu0 %v359, 127
        %v362 = vpop.permute.xlu0 %361
        %v364 = vunpack.c.l.b16 %v334
        %v365 = vpack.c.b16 %v364, %v364
        %366 = vrot.lane.b32.xlu0 %v365, 126
        %v367 = vpop.permute.xlu0 %366
        %v369 = vunpack.c.l.b16 %v340
        %v370 = vpack.c.b16 %v369, %v369
        %v371 = vrot.slane %v370, 2
        %372 = vrot.lane.b32.xlu0 %v371, 120
        %v373 = vpop.permute.xlu0 %372
        %374 = vst [vmem:[#allocation1] ss:$4 sm:$0xff] %v315
        %v375 = vld.sshfl [vmem:[#allocation1] sm:$0xff pattern:$0x73625140]
        %377 = vrot.lane.b32.xlu0 %v375, 119
        %v378 = vpop.permute.xlu0 %377
        %v380 = vunpack.c.l.b16 %v345
        %v381 = vpack.c.b16 %v380, %v380
        %v382 = vrot.slane %v381, 6
        %383 = vrot.lane.b32.xlu0 %v382, 118
        %v384 = vpop.permute.xlu0 %383
        %v386 = vunpack.c.l.b16 %v350
        %v387 = vpack.c.b16 %v386, %v386
        %388 = vrot.lane.b32.xlu0 %v387, 112
        %v389 = vpop.permute.xlu0 %388
        %s390 = scalar_lea.vmem [#allocation1], 3
        %391 = vst [vmem:[%s390] ss:$4 sm:$0xff] %v315
        %v392 = vld.sshfl [vmem:[#allocation1] sm:$0xff pattern:$0x73625140]
        %394 = vrot.lane.b32.xlu0 %v392, 111
        %v395 = vpop.permute.xlu0 %394
        %v397 = vunpack.c.l.b16 %v355
        %v398 = vpack.c.b16 %v397, %v397
        %399 = vrot.lane.b32.xlu0 %v398, 110
        %v400 = vpop.permute.xlu0 %399
        %vm401 = vcmask 1041408
        %v404 = vsel %vm401, %v323, %v362
        %vm405 = vcmask 1043456
        %v407 = vsel %vm405, %v404, %v367
        %vm408 = vcmask 1045504
        %v410 = vsel %vm408, %v407, %v373
        %v414 = vsel %vm401, %v378, %v384
        %v416 = vsel %vm405, %v414, %v389
        %v418 = vsel %vm408, %v416, %v395
        %vm420 = vcmask 293888
        %v422 = vsel %vm420, %v314, 0
        %v425 = vsel %vm401, %v400, 0
        %427 = vmatpush.bf16.msra.mxu0 0
        %428 = vmatpush.bf16.msra.mxu0 0
        %429 = vmatpush.bf16.msra.mxu0 0
        %430 = vmatpush.bf16.msra.mxu0 0
        %431 = vmatpush.bf16.msra.mxu0 0
        %432 = vmatpush.bf16.msra.mxu0 %v425
        %433 = vmatpush.bf16.msra.mxu0 %v418
        %434 = vmatpush.bf16.msra.mxu0 %v410
        %435 = vmatmul.bf16.gmra.mxu0 %v422
        %v436 = vpop.f32.mrf.mxu0
        %v437 = vadd.f32 0.0, %v436
        %v438 = vpop.f32.mrf.mxu0
        %439 = vdwg.mxu0
        %v440 = vld [vmem:[%s2] sm:$0xff]
        %442 = vset.pattern.permute.xlu0 0
        %443 = vperm.xlu0 %442, %v440
        %v444 = vpop.permute.xlu0 %443
        %v446 = vmul.f32 %v437, %v444
        %v447 = vld [vmem:[%s3] sm:$0xff]
        %449 = vset.pattern.permute.xlu0 0
        %450 = vperm.xlu0 %449, %v447
        %v451 = vpop.permute.xlu0 %450
        %v453 = vadd.f32 %v446, %v451
        %v454 = vmax.f32 %v453, 0.0
        %vm455 = vcmask 68608
        %456 = vst.msk [vmem:[#allocation3] sm:$0xf] %vm455, 0
        %vm457 = vcmask 667208
        %458 = vst.msk [vmem:[#allocation3] sm:$0xf] %vm457, 0
        %v459 = vpack.c.bf16 %v454, %v454
        %461 = vrot.lane.b32.xlu0 %v459, 9
        %v462 = vpop.permute.xlu0 %461
        %vm464 = vcmask 592968
        %465 = vst.msk [vmem:[#allocation3] sm:$0xf] %vm464, %v462
        %v466 = vld [vmem:[%s4] sm:$0xf]
        %v467 = vld [vmem:[#allocation3] sm:$0xf]
        %v468 = vunpack.c.l.bf16 %v467
        %v469 = vmul.f32 %v468, %v321
        %v470 = vpack.c.bf16 %v469, %v469
        %v471 = vmul.f32 %v468, %v331
        %v472 = vpack.c.bf16 %v471, %v471
        %v473 = vmul.f32 %v468, %v337
        %v474 = vpack.c.bf16 %v473, %v473
        %v475 = vmul.f32 %v468, %v342
        %v476 = vpack.c.bf16 %v475, %v475
        %v477 = vmul.f32 %v468, %v347
        %v478 = vpack.c.bf16 %v477, %v477
        %v479 = vmul.f32 %v468, %v352
        %v480 = vpack.c.bf16 %v479, %v479
        %v482 = vunpack.c.l.b16 %v467
        %v483 = vpack.c.b16 %v482, %v482
        %484 = vrot.lane.b32.xlu0 %v483, 127
        %v485 = vpop.permute.xlu0 %484
        %v487 = vunpack.c.l.b16 %v472
        %v488 = vpack.c.b16 %v487, %v487
        %489 = vrot.lane.b32.xlu0 %v488, 126
        %v490 = vpop.permute.xlu0 %489
        %v492 = vunpack.c.l.b16 %v474
        %v493 = vpack.c.b16 %v492, %v492
        %494 = vrot.lane.b32.xlu0 %v493, 120
        %v495 = vpop.permute.xlu0 %494
        %496 = vrot.lane.b32.xlu0 %v483, 119
        %v497 = vpop.permute.xlu0 %496
        %v499 = vunpack.c.l.b16 %v476
        %v500 = vpack.c.b16 %v499, %v499
        %501 = vrot.lane.b32.xlu0 %v500, 118
        %v502 = vpop.permute.xlu0 %501
        %v504 = vunpack.c.l.b16 %v478
        %v505 = vpack.c.b16 %v504, %v504
        %506 = vrot.lane.b32.xlu0 %v505, 112
        %v507 = vpop.permute.xlu0 %506
        %508 = vrot.lane.b32.xlu0 %v483, 111
        %v509 = vpop.permute.xlu0 %508
        %v511 = vunpack.c.l.b16 %v480
        %v512 = vpack.c.b16 %v511, %v511
        %513 = vrot.lane.b32.xlu0 %v512, 110
        %v514 = vpop.permute.xlu0 %513
        %v517 = vsel %vm405, %v470, %v485
        %v521 = vsel %vm405, %v490, %v495
        %v525 = vsel %vm405, %v497, %v502
        %v529 = vsel %vm405, %v507, %v509
        %vm531 = vcmask 588800
        %v533 = vsel %vm531, %v466, 0
        %v536 = vsel %vm405, %v514, 0
        %538 = vmatpush.bf16.msra.mxu0 0
        %539 = vmatpush.bf16.msra.mxu0 0
        %540 = vmatpush.bf16.msra.mxu0 0
        %541 = vmatpush.bf16.msra.mxu0 %v536
        %542 = vmatpush.bf16.msra.mxu0 %v529
        %543 = vmatpush.bf16.msra.mxu0 %v525
        %544 = vmatpush.bf16.msra.mxu0 %v521
        %545 = vmatpush.bf16.msra.mxu0 %v517
        %546 = vmatmul.bf16.gmra.mxu0 %v533
        %v547 = vpop.f32.mrf.mxu0
        %v548 = vadd.f32 0.0, %v547
        %v549 = vpop.f32.mrf.mxu0
        %550 = vdwg.mxu0
        %v551 = vld [vmem:[%s5] sm:$0xff]
        %553 = vset.pattern.permute.xlu0 0
        %554 = vperm.xlu0 %553, %v551
        %v555 = vpop.permute.xlu0 %554
        %v557 = vmul.f32 %v548, %v555
        %v558 = vld [vmem:[%s6] sm:$0xff]
        %560 = vset.pattern.permute.xlu0 0
        %561 = vperm.xlu0 %560, %v558
        %v562 = vpop.permute.xlu0 %561
        %v564 = vadd.f32 %v557, %v562
        %v565 = vmax.f32 %v564, 0.0
        %vm566 = vcmask 523264
        %567 = vst.msk [vmem:[%s296] sm:$0xff] %vm566, %v565
        %s568 = sand.u32 %s203, 1
        %s569 = scalar_lea.sflag [#allocation5], %s568
        %s570 = sand.u32 %s203, 1
        %s571 = smul.addr %s570, 8
        %s572 = scalar_lea.vmem [#allocation4], %s571
        // Predicated region
        $region53: #{tpu_custom_call.1} parent=51 // pred_check
          %p573 = pneg %p213
        $region54: #{tpu_custom_call.1} parent=51 // pred_check_branch
          %575 = sbr.rel (%p573) target = $region56
        $region55: #{tpu_custom_call.1} parent=51 // pred_region
          %577 = vsyncadd %s569, 0
          %s578 = smul.addr %s22, 8
          %s579 = scalar_lea.hbm %s8, %s578
          %s581 = sshll.u32 %s572, 4
          %s582 = int_to_ptr.vmem [resolvable:$true] %s581
          %s583 = sshll.u32 %s579, 4
          %s584 = int_to_ptr.hbm [resolvable:$true] %s583
          %586 = dma.vmem_to_hbm [thread:$0]  %s582, 128, %s584, %s569
        $region56: #{tpu_custom_call.1} parent=51 // pred_fallthru
          _
      $region52: #{tpu_custom_call.1} parent=5 // pred_fallthru
        _
      %p587 = scmp.le.s32.totalorder 2, %s17
      // Predicated region
      $region57: #{tpu_custom_call.1} parent=5 // pred_check
        %p588 = pneg %p587
      $region58: #{tpu_custom_call.1} parent=5 // pred_check_branch
        %590 = sbr.rel (%p588) target = $region60
      $region59: #{tpu_custom_call.1} parent=5 // pred_region
        %s591 = ssub.s32 %s17, 2
        // Predicated region
        $region61: #{tpu_custom_call.1} parent=59 // pred_check
          %p592 = pneg %p219
        $region62: #{tpu_custom_call.1} parent=59 // pred_check_branch
          %594 = sbr.rel (%p592) target = $region64
        $region63: #{tpu_custom_call.1} parent=59 // pred_region
          %s595 = sand.u32 %s204, 1
          %s596 = scalar_lea.sflag [#allocation5], %s595
          %s597 = sand.u32 %s204, 1
          %s598 = smul.addr %s597, 8
          %s599 = scalar_lea.vmem [#allocation4], %s598
          %601 = dma.done %s596, 128
        $region64: #{tpu_custom_call.1} parent=59 // pred_fallthru
          _
      $region60: #{tpu_custom_call.1} parent=5 // pred_fallthru
        _
    $region6: #{tpu_custom_call.1} parent=1 // loop_footer
      %s21 = sadd.s32 1, %s17
    $region7: #{tpu_custom_call.1} parent=1 // loop_footer_branch
      %16 = sbr.rel target = $region3
    $region8: #{tpu_custom_call.1} parent=1 // loop_exit
      _
    %602 = vsyncpa [#allocation5], 1
    %s603 = scalar_lea.sflag [#allocation5], 1
    %604 = vsyncpa %s603, 1

</llo_original>
